<compile_context>
chip_gen: v7x
topology: tpu7x:2x2x1
jax: 0.10.0
libtpu: 0.0.40
codegen_flags: <defaults>
</compile_context>

<pallas_src>
import jax
import jax.numpy as jnp
from jax.experimental import pallas as pl
from jax.experimental.pallas import tpu as pltpu


def lstm_kernel(x_ref, w_ih_ref, w_hh_ref, b_ref, w_out_ref, b_out_ref, out_ref):
    """One batch chunk, whole sequence; recurrence fully unrolled (static T)."""
    T, B, D = x_ref.shape
    H = w_hh_ref.shape[0]
    f32 = jnp.float32
    bf16 = jnp.bfloat16

    # --- batched input projection for all timesteps: one single-pass bf16 MXU
    #     matmul + one bias broadcast, hoisted off the recurrence's serial
    #     path.  Result stays in vregs (no VMEM roundtrip); per-step slices
    #     below are static and sublane-aligned (B % 8 == 0).
    x_all = x_ref[...].reshape(T * B, D).astype(bf16)              # (T*B, D)
    w_ih = w_ih_ref[...].astype(bf16)                              # (D, 4H)
    xw = jnp.dot(x_all, w_ih, preferred_element_type=f32)          # (T*B, 4H)
    xw = xw + b_ref[...]                                           # broadcast once

    # Recurrent weight hoisted + cast once (single 32x128 bf16 tile).
    w_hh = w_hh_ref[...].astype(bf16)                              # (H, 4H)

    h = jnp.zeros((B, H), f32)
    c = jnp.zeros((B, H), f32)

    # Fully-unrolled time loop (T=8): only the small bf16 h @ W_hh^T dot and a
    # handful of full-width VPU/EUP ops sit on the per-step serial chain.
    # TODO(synk): for long sequences chunk T with a grid axis / emit_pipeline
    # and spill xw to (bf16) VMEM instead of keeping it in vregs.
    for t in range(T):
        gates = xw[t * B:(t + 1) * B, :] + jnp.dot(
            h.astype(bf16), w_hh, preferred_element_type=f32)      # (B, 4H) f32
        # Full 128-lane transcendentals: 2 EUP pushes per step.
        sig = jax.nn.sigmoid(gates)
        th = jnp.tanh(gates)
        i_g = sig[:, 0 * H:1 * H]
        f_g = sig[:, 1 * H:2 * H]
        g_g = th[:, 2 * H:3 * H]
        o_g = sig[:, 3 * H:4 * H]
        c = f_g * c + i_g * g_g
        h = o_g * jnp.tanh(c)

    # --- head: out = sigmoid(Linear(relu(lstm_out[-1]))) ----------------------
    # N=1 matmul replaced with a lane reduction (XLU/VPU) so no MXU pass is
    # burned; bias read from SMEM.
    z = jnp.maximum(h, 0.0)
    logit = jnp.sum(z * w_out_ref[...], axis=-1, keepdims=True) + b_out_ref[0]
    out_ref[...] = jax.nn.sigmoid(logit).astype(out_ref.dtype)


def lstm_forward_pallas(x, w_ih, w_hh, b_ih, b_hh, w_out, b_out):
    T, B, D = x.shape
    H = w_hh.shape[1]
    assert w_ih.shape == (4 * H, D) and w_hh.shape == (4 * H, H)

    # Batch padded to full 8-sublane chunks; each chunk is an independent
    # recurrence -> "parallel" grid axis (shards across the two v7x TCs when
    # batch grows).  Padded rows are sliced off below.
    B_BLK = 8
    B_pad = ((B + B_BLK - 1) // B_BLK) * B_BLK
    x_p = jnp.pad(x.astype(jnp.float32), ((0, 0), (0, B_pad - B), (0, 0)))

    w_ih_t = jnp.asarray(w_ih.T, jnp.float32)                      # (D, 4H)
    w_hh_t = jnp.asarray(w_hh.T, jnp.float32)                      # (H, 4H)
    b = (b_ih + b_hh).reshape(1, 4 * H).astype(jnp.float32)
    w_out_row = jnp.asarray(w_out, jnp.float32).reshape(1, H)      # (1, H)
    b_out1 = jnp.asarray(b_out, jnp.float32).reshape(1)            # (1,) -> SMEM

    out_pad = pl.pallas_call(
        lstm_kernel,
        out_shape=jax.ShapeDtypeStruct((B_pad, 1), jnp.float32),
        grid_spec=pltpu.PrefetchScalarGridSpec(
            num_scalar_prefetch=0,
            grid=(B_pad // B_BLK,),                                 # batch chunks
            in_specs=[
                pl.BlockSpec((T, B_BLK, D), lambda i: (0, i, 0)),   # x chunk
                pl.BlockSpec((D, 4 * H), lambda i: (0, 0)),         # W_ih^T
                pl.BlockSpec((H, 4 * H), lambda i: (0, 0)),         # W_hh^T
                pl.BlockSpec((1, 4 * H), lambda i: (0, 0)),         # b_ih + b_hh
                pl.BlockSpec((1, H), lambda i: (0, 0)),             # head weight
                pl.BlockSpec(memory_space=pltpu.MemorySpace.SMEM),  # head bias
            ],
            out_specs=pl.BlockSpec((B_BLK, 1), lambda i: (i, 0)),
        ),
        compiler_params=pltpu.CompilerParams(
            dimension_semantics=("parallel",)),                     # independent chunks
    )(x_p, w_ih_t, w_hh_t, b, w_out_row, b_out1)

    return out_pad[:B]


def lstm_forward_ref(x, w_ih, w_hh, b_ih, b_hh, w_out, b_out):
    """Pure-JAX reference matching torch nn.LSTM + Linear + Sigmoid semantics."""
    T, B, D = x.shape
    H = w_hh.shape[1]

    def step(carry, x_t):
        h, c = carry
        gates = x_t @ w_ih.T + b_ih + h @ w_hh.T + b_hh
        i, f, g, o = jnp.split(gates, 4, axis=-1)
        i = jax.nn.sigmoid(i); f = jax.nn.sigmoid(f)
        g = jnp.tanh(g); o = jax.nn.sigmoid(o)
        c = f * c + i * g
        h = o * jnp.tanh(c)
        return (h, c), None

    (h, _), _ = jax.lax.scan(step,
                             (jnp.zeros((B, H), jnp.float32),
                              jnp.zeros((B, H), jnp.float32)), x)
    z = jnp.maximum(h, 0.0)
    return jax.nn.sigmoid(z @ w_out.T + b_out)


if __name__ == "__main__":
    # config: {'w2v_size': 128, 'hidden': 32}; small synthetic shapes
    SEQ, BATCH, W2V, HIDDEN = 8, 4, 128, 32

    key = jax.random.PRNGKey(0)
    ks = jax.random.split(key, 7)
    bound = 1.0 / (HIDDEN ** 0.5)  # torch reset_parameters: U(-1/sqrt(H), 1/sqrt(H))

    w_ih = jax.random.uniform(ks[0], (4 * HIDDEN, W2V), jnp.float32, -bound, bound)
    w_hh = jax.random.uniform(ks[1], (4 * HIDDEN, HIDDEN), jnp.float32, -bound, bound)
    b_ih = jax.random.uniform(ks[2], (4 * HIDDEN,), jnp.float32, -bound, bound)
    b_hh = jax.random.uniform(ks[3], (4 * HIDDEN,), jnp.float32, -bound, bound)
    w_out = jax.random.uniform(ks[4], (1, HIDDEN), jnp.float32, -bound, bound)
    b_out = jax.random.uniform(ks[5], (1,), jnp.float32, -bound, bound)

    # normalized input tensor (seq, batch, w2v) -- stands in for the w2v/tfidf
    # preprocessing.  Guard the divide against near-zero sums (harness only).
    x = jax.random.normal(ks[6], (SEQ, BATCH, W2V), jnp.float32)
    denom = jnp.sum(x, axis=-1, keepdims=True)
    denom = jnp.where(jnp.abs(denom) < 1e-3, 1.0, denom)
    x = x / denom

    out = lstm_forward_pallas(x, w_ih, w_hh, b_ih, b_hh, w_out, b_out)
    out = jax.block_until_ready(out)

    ref = lstm_forward_ref(x, w_ih, w_hh, b_ih, b_hh, w_out, b_out)
    assert out.shape == (BATCH, 1)
    # bf16 MXU operands in the kernel (f32 accumulation) vs. the f32 reference:
    # tolerance loosened per the perf review.
    assert jnp.allclose(out, ref, atol=2e-2, rtol=2e-2), (out, ref)

    print("KERNEL_OK")
</pallas_src>

<mosaic_0001>
module attributes {stable_mosaic.version = 11 : i64} {
  func.func @lstm_kernel(%arg0: i32, %arg1: memref<8x8x128xf32, #tpu.memory_space<vmem>>, %arg2: memref<128x128xf32, #tpu.memory_space<vmem>>, %arg3: memref<32x128xf32, #tpu.memory_space<vmem>>, %arg4: memref<1x128xf32, #tpu.memory_space<vmem>>, %arg5: memref<1x32xf32, #tpu.memory_space<vmem>>, %arg6: memref<1xf32, #tpu.memory_space<smem>>, %arg7: memref<8x1xf32, #tpu.memory_space<vmem>>) attributes {dimension_semantics = [#tpu.dimension_semantics<parallel>], iteration_bounds = array<i64: 1>, scalar_prefetch = 0 : i64, scratch_operands = 0 : i64, tpu.core_type = #tpu.core_type<tc>, window_params = [{transform_indices = @transform_0, window_bounds = array<i64: 8, 8, 128>}, {pipeline_mode = #tpu.pipeline_mode<synchronous>, transform_indices = @transform_1, window_bounds = array<i64: 128, 128>}, {pipeline_mode = #tpu.pipeline_mode<synchronous>, transform_indices = @transform_2, window_bounds = array<i64: 32, 128>}, {pipeline_mode = #tpu.pipeline_mode<synchronous>, transform_indices = @transform_3, window_bounds = array<i64: 1, 128>}, {pipeline_mode = #tpu.pipeline_mode<synchronous>, transform_indices = @transform_4, window_bounds = array<i64: 1, 32>}, {transform_indices = @transform_5, window_bounds = array<i64: 1>}, {transform_indices = @transform_6, window_bounds = array<i64: 8, 1>}]} {
    %c0 = arith.constant 0 : index
    %c0_0 = arith.constant 0 : index
    %c0_1 = arith.constant 0 : index
    %0 = vector.load %arg1[%c0, %c0_0, %c0_1] : memref<8x8x128xf32, #tpu.memory_space<vmem>>, vector<8x8x128xf32>
    %1 = vector.shape_cast %0 : vector<8x8x128xf32> to vector<64x128xf32>
    %2 = arith.truncf %1 : vector<64x128xf32> to vector<64x128xbf16>
    %c0_2 = arith.constant 0 : index
    %c0_3 = arith.constant 0 : index
    %3 = vector.load %arg2[%c0_2, %c0_3] : memref<128x128xf32, #tpu.memory_space<vmem>>, vector<128x128xf32>
    %4 = arith.truncf %3 : vector<128x128xf32> to vector<128x128xbf16>
    %cst = arith.constant dense<0.000000e+00> : vector<64x128xf32>
    %5 = tpu.matmul %2, %4, %cst {dimension_numbers = #tpu.dot_dimension_numbers<[1], [0], [0], [1], [0, 0, 1, 1], [], []>} : vector<64x128xbf16>, vector<128x128xbf16>, vector<64x128xf32> -> vector<64x128xf32>
    %c0_4 = arith.constant 0 : index
    %c0_5 = arith.constant 0 : index
    %6 = vector.load %arg4[%c0_4, %c0_5] : memref<1x128xf32, #tpu.memory_space<vmem>>, vector<1x128xf32>
    %7 = vector.broadcast %6 : vector<1x128xf32> to vector<64x128xf32>
    %8 = arith.addf %5, %7 : vector<64x128xf32>
    %c0_6 = arith.constant 0 : index
    %c0_7 = arith.constant 0 : index
    %9 = vector.load %arg3[%c0_6, %c0_7] : memref<32x128xf32, #tpu.memory_space<vmem>>, vector<32x128xf32>
    %10 = arith.truncf %9 : vector<32x128xf32> to vector<32x128xbf16>
    %cst_8 = arith.constant 0.000000e+00 : f32
    %11 = vector.broadcast %cst_8 : f32 to vector<8x32xf32>
    %cst_9 = arith.constant 0.000000e+00 : f32
    %12 = vector.broadcast %cst_9 : f32 to vector<8x32xf32>
    %13 = vector.extract_strided_slice %8 {offsets = [0, 0], sizes = [8, 128], strides = [1, 1]} : vector<64x128xf32> to vector<8x128xf32>
    %14 = arith.truncf %11 : vector<8x32xf32> to vector<8x32xbf16>
    %cst_10 = arith.constant dense<0.000000e+00> : vector<8x128xf32>
    %15 = tpu.matmul %14, %10, %cst_10 {dimension_numbers = #tpu.dot_dimension_numbers<[1], [0], [0], [1], [0, 0, 1, 1], [], []>} : vector<8x32xbf16>, vector<32x128xbf16>, vector<8x128xf32> -> vector<8x128xf32>
    %16 = arith.addf %13, %15 : vector<8x128xf32>
    %17 = arith.negf %16 : vector<8x128xf32>
    %18 = math.exp %17 : vector<8x128xf32>
    %cst_11 = arith.constant 1.000000e+00 : f32
    %19 = vector.broadcast %cst_11 : f32 to vector<8x128xf32>
    %20 = arith.addf %19, %18 : vector<8x128xf32>
    %21 = arith.divf %19, %20 : vector<8x128xf32>
    %22 = math.tanh %16 : vector<8x128xf32>
    %23 = vector.extract_strided_slice %21 {offsets = [0, 0], sizes = [8, 32], strides = [1, 1]} : vector<8x128xf32> to vector<8x32xf32>
    %24 = vector.extract_strided_slice %21 {offsets = [0, 32], sizes = [8, 32], strides = [1, 1]} : vector<8x128xf32> to vector<8x32xf32>
    %25 = vector.extract_strided_slice %22 {offsets = [0, 64], sizes = [8, 32], strides = [1, 1]} : vector<8x128xf32> to vector<8x32xf32>
    %26 = vector.extract_strided_slice %21 {offsets = [0, 96], sizes = [8, 32], strides = [1, 1]} : vector<8x128xf32> to vector<8x32xf32>
    %27 = arith.mulf %24, %12 : vector<8x32xf32>
    %28 = arith.mulf %23, %25 : vector<8x32xf32>
    %29 = arith.addf %27, %28 : vector<8x32xf32>
    %30 = math.tanh %29 : vector<8x32xf32>
    %31 = arith.mulf %26, %30 : vector<8x32xf32>
    %32 = vector.extract_strided_slice %8 {offsets = [8, 0], sizes = [8, 128], strides = [1, 1]} : vector<64x128xf32> to vector<8x128xf32>
    %33 = arith.truncf %31 : vector<8x32xf32> to vector<8x32xbf16>
    %cst_12 = arith.constant dense<0.000000e+00> : vector<8x128xf32>
    %34 = tpu.matmul %33, %10, %cst_12 {dimension_numbers = #tpu.dot_dimension_numbers<[1], [0], [0], [1], [0, 0, 1, 1], [], []>} : vector<8x32xbf16>, vector<32x128xbf16>, vector<8x128xf32> -> vector<8x128xf32>
    %35 = arith.addf %32, %34 : vector<8x128xf32>
    %36 = arith.negf %35 : vector<8x128xf32>
    %37 = math.exp %36 : vector<8x128xf32>
    %cst_13 = arith.constant 1.000000e+00 : f32
    %38 = vector.broadcast %cst_13 : f32 to vector<8x128xf32>
    %39 = arith.addf %38, %37 : vector<8x128xf32>
    %40 = arith.divf %38, %39 : vector<8x128xf32>
    %41 = math.tanh %35 : vector<8x128xf32>
    %42 = vector.extract_strided_slice %40 {offsets = [0, 0], sizes = [8, 32], strides = [1, 1]} : vector<8x128xf32> to vector<8x32xf32>
    %43 = vector.extract_strided_slice %40 {offsets = [0, 32], sizes = [8, 32], strides = [1, 1]} : vector<8x128xf32> to vector<8x32xf32>
    %44 = vector.extract_strided_slice %41 {offsets = [0, 64], sizes = [8, 32], strides = [1, 1]} : vector<8x128xf32> to vector<8x32xf32>
    %45 = vector.extract_strided_slice %40 {offsets = [0, 96], sizes = [8, 32], strides = [1, 1]} : vector<8x128xf32> to vector<8x32xf32>
    %46 = arith.mulf %43, %29 : vector<8x32xf32>
    %47 = arith.mulf %42, %44 : vector<8x32xf32>
    %48 = arith.addf %46, %47 : vector<8x32xf32>
    %49 = math.tanh %48 : vector<8x32xf32>
    %50 = arith.mulf %45, %49 : vector<8x32xf32>
    %51 = vector.extract_strided_slice %8 {offsets = [16, 0], sizes = [8, 128], strides = [1, 1]} : vector<64x128xf32> to vector<8x128xf32>
    %52 = arith.truncf %50 : vector<8x32xf32> to vector<8x32xbf16>
    %cst_14 = arith.constant dense<0.000000e+00> : vector<8x128xf32>
    %53 = tpu.matmul %52, %10, %cst_14 {dimension_numbers = #tpu.dot_dimension_numbers<[1], [0], [0], [1], [0, 0, 1, 1], [], []>} : vector<8x32xbf16>, vector<32x128xbf16>, vector<8x128xf32> -> vector<8x128xf32>
    %54 = arith.addf %51, %53 : vector<8x128xf32>
    %55 = arith.negf %54 : vector<8x128xf32>
    %56 = math.exp %55 : vector<8x128xf32>
    %cst_15 = arith.constant 1.000000e+00 : f32
    %57 = vector.broadcast %cst_15 : f32 to vector<8x128xf32>
    %58 = arith.addf %57, %56 : vector<8x128xf32>
    %59 = arith.divf %57, %58 : vector<8x128xf32>
    %60 = math.tanh %54 : vector<8x128xf32>
    %61 = vector.extract_strided_slice %59 {offsets = [0, 0], sizes = [8, 32], strides = [1, 1]} : vector<8x128xf32> to vector<8x32xf32>
    %62 = vector.extract_strided_slice %59 {offsets = [0, 32], sizes = [8, 32], strides = [1, 1]} : vector<8x128xf32> to vector<8x32xf32>
    %63 = vector.extract_strided_slice %60 {offsets = [0, 64], sizes = [8, 32], strides = [1, 1]} : vector<8x128xf32> to vector<8x32xf32>
    %64 = vector.extract_strided_slice %59 {offsets = [0, 96], sizes = [8, 32], strides = [1, 1]} : vector<8x128xf32> to vector<8x32xf32>
    %65 = arith.mulf %62, %48 : vector<8x32xf32>
    %66 = arith.mulf %61, %63 : vector<8x32xf32>
    %67 = arith.addf %65, %66 : vector<8x32xf32>
    %68 = math.tanh %67 : vector<8x32xf32>
    %69 = arith.mulf %64, %68 : vector<8x32xf32>
    %70 = vector.extract_strided_slice %8 {offsets = [24, 0], sizes = [8, 128], strides = [1, 1]} : vector<64x128xf32> to vector<8x128xf32>
    %71 = arith.truncf %69 : vector<8x32xf32> to vector<8x32xbf16>
    %cst_16 = arith.constant dense<0.000000e+00> : vector<8x128xf32>
    %72 = tpu.matmul %71, %10, %cst_16 {dimension_numbers = #tpu.dot_dimension_numbers<[1], [0], [0], [1], [0, 0, 1, 1], [], []>} : vector<8x32xbf16>, vector<32x128xbf16>, vector<8x128xf32> -> vector<8x128xf32>
    %73 = arith.addf %70, %72 : vector<8x128xf32>
    %74 = arith.negf %73 : vector<8x128xf32>
    %75 = math.exp %74 : vector<8x128xf32>
    %cst_17 = arith.constant 1.000000e+00 : f32
    %76 = vector.broadcast %cst_17 : f32 to vector<8x128xf32>
    %77 = arith.addf %76, %75 : vector<8x128xf32>
    %78 = arith.divf %76, %77 : vector<8x128xf32>
    %79 = math.tanh %73 : vector<8x128xf32>
    %80 = vector.extract_strided_slice %78 {offsets = [0, 0], sizes = [8, 32], strides = [1, 1]} : vector<8x128xf32> to vector<8x32xf32>
    %81 = vector.extract_strided_slice %78 {offsets = [0, 32], sizes = [8, 32], strides = [1, 1]} : vector<8x128xf32> to vector<8x32xf32>
    %82 = vector.extract_strided_slice %79 {offsets = [0, 64], sizes = [8, 32], strides = [1, 1]} : vector<8x128xf32> to vector<8x32xf32>
    %83 = vector.extract_strided_slice %78 {offsets = [0, 96], sizes = [8, 32], strides = [1, 1]} : vector<8x128xf32> to vector<8x32xf32>
    %84 = arith.mulf %81, %67 : vector<8x32xf32>
    %85 = arith.mulf %80, %82 : vector<8x32xf32>
    %86 = arith.addf %84, %85 : vector<8x32xf32>
    %87 = math.tanh %86 : vector<8x32xf32>
    %88 = arith.mulf %83, %87 : vector<8x32xf32>
    %89 = vector.extract_strided_slice %8 {offsets = [32, 0], sizes = [8, 128], strides = [1, 1]} : vector<64x128xf32> to vector<8x128xf32>
    %90 = arith.truncf %88 : vector<8x32xf32> to vector<8x32xbf16>
    %cst_18 = arith.constant dense<0.000000e+00> : vector<8x128xf32>
    %91 = tpu.matmul %90, %10, %cst_18 {dimension_numbers = #tpu.dot_dimension_numbers<[1], [0], [0], [1], [0, 0, 1, 1], [], []>} : vector<8x32xbf16>, vector<32x128xbf16>, vector<8x128xf32> -> vector<8x128xf32>
    %92 = arith.addf %89, %91 : vector<8x128xf32>
    %93 = arith.negf %92 : vector<8x128xf32>
    %94 = math.exp %93 : vector<8x128xf32>
    %cst_19 = arith.constant 1.000000e+00 : f32
    %95 = vector.broadcast %cst_19 : f32 to vector<8x128xf32>
    %96 = arith.addf %95, %94 : vector<8x128xf32>
    %97 = arith.divf %95, %96 : vector<8x128xf32>
    %98 = math.tanh %92 : vector<8x128xf32>
    %99 = vector.extract_strided_slice %97 {offsets = [0, 0], sizes = [8, 32], strides = [1, 1]} : vector<8x128xf32> to vector<8x32xf32>
    %100 = vector.extract_strided_slice %97 {offsets = [0, 32], sizes = [8, 32], strides = [1, 1]} : vector<8x128xf32> to vector<8x32xf32>
    %101 = vector.extract_strided_slice %98 {offsets = [0, 64], sizes = [8, 32], strides = [1, 1]} : vector<8x128xf32> to vector<8x32xf32>
    %102 = vector.extract_strided_slice %97 {offsets = [0, 96], sizes = [8, 32], strides = [1, 1]} : vector<8x128xf32> to vector<8x32xf32>
    %103 = arith.mulf %100, %86 : vector<8x32xf32>
    %104 = arith.mulf %99, %101 : vector<8x32xf32>
    %105 = arith.addf %103, %104 : vector<8x32xf32>
    %106 = math.tanh %105 : vector<8x32xf32>
    %107 = arith.mulf %102, %106 : vector<8x32xf32>
    %108 = vector.extract_strided_slice %8 {offsets = [40, 0], sizes = [8, 128], strides = [1, 1]} : vector<64x128xf32> to vector<8x128xf32>
    %109 = arith.truncf %107 : vector<8x32xf32> to vector<8x32xbf16>
    %cst_20 = arith.constant dense<0.000000e+00> : vector<8x128xf32>
    %110 = tpu.matmul %109, %10, %cst_20 {dimension_numbers = #tpu.dot_dimension_numbers<[1], [0], [0], [1], [0, 0, 1, 1], [], []>} : vector<8x32xbf16>, vector<32x128xbf16>, vector<8x128xf32> -> vector<8x128xf32>
    %111 = arith.addf %108, %110 : vector<8x128xf32>
    %112 = arith.negf %111 : vector<8x128xf32>
    %113 = math.exp %112 : vector<8x128xf32>
    %cst_21 = arith.constant 1.000000e+00 : f32
    %114 = vector.broadcast %cst_21 : f32 to vector<8x128xf32>
    %115 = arith.addf %114, %113 : vector<8x128xf32>
    %116 = arith.divf %114, %115 : vector<8x128xf32>
    %117 = math.tanh %111 : vector<8x128xf32>
    %118 = vector.extract_strided_slice %116 {offsets = [0, 0], sizes = [8, 32], strides = [1, 1]} : vector<8x128xf32> to vector<8x32xf32>
    %119 = vector.extract_strided_slice %116 {offsets = [0, 32], sizes = [8, 32], strides = [1, 1]} : vector<8x128xf32> to vector<8x32xf32>
    %120 = vector.extract_strided_slice %117 {offsets = [0, 64], sizes = [8, 32], strides = [1, 1]} : vector<8x128xf32> to vector<8x32xf32>
    %121 = vector.extract_strided_slice %116 {offsets = [0, 96], sizes = [8, 32], strides = [1, 1]} : vector<8x128xf32> to vector<8x32xf32>
    %122 = arith.mulf %119, %105 : vector<8x32xf32>
    %123 = arith.mulf %118, %120 : vector<8x32xf32>
    %124 = arith.addf %122, %123 : vector<8x32xf32>
    %125 = math.tanh %124 : vector<8x32xf32>
    %126 = arith.mulf %121, %125 : vector<8x32xf32>
    %127 = vector.extract_strided_slice %8 {offsets = [48, 0], sizes = [8, 128], strides = [1, 1]} : vector<64x128xf32> to vector<8x128xf32>
    %128 = arith.truncf %126 : vector<8x32xf32> to vector<8x32xbf16>
    %cst_22 = arith.constant dense<0.000000e+00> : vector<8x128xf32>
    %129 = tpu.matmul %128, %10, %cst_22 {dimension_numbers = #tpu.dot_dimension_numbers<[1], [0], [0], [1], [0, 0, 1, 1], [], []>} : vector<8x32xbf16>, vector<32x128xbf16>, vector<8x128xf32> -> vector<8x128xf32>
    %130 = arith.addf %127, %129 : vector<8x128xf32>
    %131 = arith.negf %130 : vector<8x128xf32>
    %132 = math.exp %131 : vector<8x128xf32>
    %cst_23 = arith.constant 1.000000e+00 : f32
    %133 = vector.broadcast %cst_23 : f32 to vector<8x128xf32>
    %134 = arith.addf %133, %132 : vector<8x128xf32>
    %135 = arith.divf %133, %134 : vector<8x128xf32>
    %136 = math.tanh %130 : vector<8x128xf32>
    %137 = vector.extract_strided_slice %135 {offsets = [0, 0], sizes = [8, 32], strides = [1, 1]} : vector<8x128xf32> to vector<8x32xf32>
    %138 = vector.extract_strided_slice %135 {offsets = [0, 32], sizes = [8, 32], strides = [1, 1]} : vector<8x128xf32> to vector<8x32xf32>
    %139 = vector.extract_strided_slice %136 {offsets = [0, 64], sizes = [8, 32], strides = [1, 1]} : vector<8x128xf32> to vector<8x32xf32>
    %140 = vector.extract_strided_slice %135 {offsets = [0, 96], sizes = [8, 32], strides = [1, 1]} : vector<8x128xf32> to vector<8x32xf32>
    %141 = arith.mulf %138, %124 : vector<8x32xf32>
    %142 = arith.mulf %137, %139 : vector<8x32xf32>
    %143 = arith.addf %141, %142 : vector<8x32xf32>
    %144 = math.tanh %143 : vector<8x32xf32>
    %145 = arith.mulf %140, %144 : vector<8x32xf32>
    %146 = vector.extract_strided_slice %8 {offsets = [56, 0], sizes = [8, 128], strides = [1, 1]} : vector<64x128xf32> to vector<8x128xf32>
    %147 = arith.truncf %145 : vector<8x32xf32> to vector<8x32xbf16>
    %cst_24 = arith.constant dense<0.000000e+00> : vector<8x128xf32>
    %148 = tpu.matmul %147, %10, %cst_24 {dimension_numbers = #tpu.dot_dimension_numbers<[1], [0], [0], [1], [0, 0, 1, 1], [], []>} : vector<8x32xbf16>, vector<32x128xbf16>, vector<8x128xf32> -> vector<8x128xf32>
    %149 = arith.addf %146, %148 : vector<8x128xf32>
    %150 = arith.negf %149 : vector<8x128xf32>
    %151 = math.exp %150 : vector<8x128xf32>
    %cst_25 = arith.constant 1.000000e+00 : f32
    %152 = vector.broadcast %cst_25 : f32 to vector<8x128xf32>
    %153 = arith.addf %152, %151 : vector<8x128xf32>
    %154 = arith.divf %152, %153 : vector<8x128xf32>
    %155 = math.tanh %149 : vector<8x128xf32>
    %156 = vector.extract_strided_slice %154 {offsets = [0, 0], sizes = [8, 32], strides = [1, 1]} : vector<8x128xf32> to vector<8x32xf32>
    %157 = vector.extract_strided_slice %154 {offsets = [0, 32], sizes = [8, 32], strides = [1, 1]} : vector<8x128xf32> to vector<8x32xf32>
    %158 = vector.extract_strided_slice %155 {offsets = [0, 64], sizes = [8, 32], strides = [1, 1]} : vector<8x128xf32> to vector<8x32xf32>
    %159 = vector.extract_strided_slice %154 {offsets = [0, 96], sizes = [8, 32], strides = [1, 1]} : vector<8x128xf32> to vector<8x32xf32>
    %160 = arith.mulf %157, %143 : vector<8x32xf32>
    %161 = arith.mulf %156, %158 : vector<8x32xf32>
    %162 = arith.addf %160, %161 : vector<8x32xf32>
    %163 = math.tanh %162 : vector<8x32xf32>
    %164 = arith.mulf %159, %163 : vector<8x32xf32>
    %cst_26 = arith.constant 0.000000e+00 : f32
    %165 = vector.broadcast %cst_26 : f32 to vector<8x32xf32>
    %166 = arith.maximumf %164, %165 : vector<8x32xf32>
    %c0_27 = arith.constant 0 : index
    %c0_28 = arith.constant 0 : index
    %167 = vector.load %arg5[%c0_27, %c0_28] : memref<1x32xf32, #tpu.memory_space<vmem>>, vector<1x32xf32>
    %168 = vector.broadcast %167 : vector<1x32xf32> to vector<8x32xf32>
    %169 = arith.mulf %166, %168 : vector<8x32xf32>
    %cst_29 = arith.constant dense<0.000000e+00> : vector<8xf32>
    %170 = vector.multi_reduction <add>, %169, %cst_29 [1] : vector<8x32xf32> to vector<8xf32>
    %171 = vector.shape_cast %170 : vector<8xf32> to vector<8x1xf32>
    %c0_30 = arith.constant 0 : index
    %172 = memref.load %arg6[%c0_30] : memref<1xf32, #tpu.memory_space<smem>>
    %173 = vector.broadcast %172 : f32 to vector<8x1xf32>
    %174 = arith.addf %171, %173 : vector<8x1xf32>
    %175 = arith.negf %174 : vector<8x1xf32>
    %176 = math.exp %175 : vector<8x1xf32>
    %cst_31 = arith.constant 1.000000e+00 : f32
    %177 = vector.broadcast %cst_31 : f32 to vector<8x1xf32>
    %178 = arith.addf %177, %176 : vector<8x1xf32>
    %179 = arith.divf %177, %178 : vector<8x1xf32>
    %c0_32 = arith.constant 0 : index
    %c0_33 = arith.constant 0 : index
    %180 = vector.load %arg7[%c0_32, %c0_33] : memref<8x1xf32, #tpu.memory_space<vmem>>, vector<8x1xf32>
    tpu.vector_store %arg7[%c0_32, %c0_33], %179 {strides = array<i32>} : memref<8x1xf32, #tpu.memory_space<vmem>>, vector<8x1xf32>,
    return
  }
  func.func @transform_0(%arg0: i32) -> (i32, i32, i32) {
    %c0_i32 = arith.constant 0 : i32
    %c0_i32_0 = arith.constant 0 : i32
    %c0_i32_1 = arith.constant 0 : i32
    return %c0_i32, %arg0, %c0_i32_0 : i32, i32, i32
  }
  func.func @transform_1(%arg0: i32) -> (i32, i32) {
    %c0_i32 = arith.constant 0 : i32
    %c0_i32_0 = arith.constant 0 : i32
    %c0_i32_1 = arith.constant 0 : i32
    return %c0_i32, %c0_i32_0 : i32, i32
  }
  func.func @transform_2(%arg0: i32) -> (i32, i32) {
    %c0_i32 = arith.constant 0 : i32
    %c0_i32_0 = arith.constant 0 : i32
    %c0_i32_1 = arith.constant 0 : i32
    return %c0_i32, %c0_i32_0 : i32, i32
  }
  func.func @transform_3(%arg0: i32) -> (i32, i32) {
    %c0_i32 = arith.constant 0 : i32
    %c0_i32_0 = arith.constant 0 : i32
    %c0_i32_1 = arith.constant 0 : i32
    return %c0_i32, %c0_i32_0 : i32, i32
  }
  func.func @transform_4(%arg0: i32) -> (i32, i32) {
    %c0_i32 = arith.constant 0 : i32
    %c0_i32_0 = arith.constant 0 : i32
    %c0_i32_1 = arith.constant 0 : i32
    return %c0_i32, %c0_i32_0 : i32, i32
  }
  func.func @transform_5(%arg0: i32) -> i32 {
    %c0_i32 = arith.constant 0 : i32
    %c0_i32_0 = arith.constant 0 : i32
    return %c0_i32 : i32
  }
  func.func @transform_6(%arg0: i32) -> (i32, i32) {
    %c0_i32 = arith.constant 0 : i32
    %c0_i32_0 = arith.constant 0 : i32
    return %arg0, %c0_i32 : i32, i32
  }
}

</mosaic_0001>

<llo_original>
// kernel: tpu_custom_call.1
$region0: #{tpu_custom_call.1}
  #allocation0 [shape = 'u32[]', space=smem, size = 0x4, offset = 0x4, fixed_abs, tag = 'smem constant byte address 0x4 - core index']
  #allocation1 [shape = 'u32[144,128]{1,0:T(1,128)}', space=vmem, size = 0x12000, scoped, tag = 'internal scratch']
  #allocation2 [shape = 'f32[1]{0:T(128)S(6)}', space=smem, size = 0x200, scoped, tag = 'scoped memory for tpu_custom_call.1']
  %s0 = inlined_call_operand.hbm [shape: f32[8,8,128], index: 0, kind: input, shape index: {}]
  %s1 = inlined_call_operand.hbm [shape: f32[128,128], index: 1, kind: input, shape index: {}]
  %s2 = inlined_call_operand.hbm [shape: f32[32,128], index: 2, kind: input, shape index: {}]
  %s3 = inlined_call_operand.vmem [shape: f32[1,128], index: 3, kind: input, shape index: {}]
  %s4 = inlined_call_operand.vmem [shape: f32[1,32], index: 4, kind: input, shape index: {}]
  %s5 = inlined_call_operand.<no memory space> [shape: f32[1], index: 5, kind: input, shape index: {}]
  %s6 = inlined_call_operand.vmem [shape: f32[8,1], index: 6, kind: output, shape index: {}]
  %s7 = sld [smem:[#allocation0]]
  $region46: #{tpu_custom_call.1} parent=0
    _
  %s9 = ssub.s32 1, %s7
  %s10 = scalar_select 0, %s9, %s7
  %11 = sst [smem:[#allocation2]] %s5
  $region1: #{tpu_custom_call.1} parent=0
    #allocation3 [shape = 'u8[32768]{0}', space=vmem, size = 0x8000, scoped, tag = 'input window, operand 0, single buffered']
    #allocation4 [shape = 's32[1]{0}', space=sflag, size = 0x4, scoped, tag = 'scoped memory for tpu_custom_call.1']
    #allocation5 [shape = 'u8[65536]{0}', space=vmem, size = 0x10000, scoped, tag = 'input window, operand 1, single buffered']
    #allocation6 [shape = 's32[1]{0}', space=sflag, size = 0x4, scoped, tag = 'scoped memory for tpu_custom_call.1']
    #allocation7 [shape = 'u8[16384]{0}', space=vmem, size = 0x4000, scoped, tag = 'input window, operand 2, single buffered']
    %12 = vsyncpa [#allocation4], 0
    %13 = vsyncpa [#allocation6], 0
    // Predicated region
    $region2: #{tpu_custom_call.1} parent=1 // pred_check
      _
    $region3: #{tpu_custom_call.1} parent=1 // pred_check_branch
      %15 = sbr.rel (0) target = $region5
    $region4: #{tpu_custom_call.1} parent=1 // pred_region
      %s17 = ssub.s32 1024, 1024
      %18 = vsyncadd [#allocation4], %s17
      %s19 = sshll.u32 [#allocation3], 4
      %s20 = int_to_ptr.vmem [resolvable:$true] %s19
      %25 = dma.hbm_to_vmem [thread:$0]  %s0, 1024, %s20, [#allocation4], 128, 128, 8
    $region5: #{tpu_custom_call.1} parent=1 // pred_fallthru
      _
    // Predicated region
    $region6: #{tpu_custom_call.1} parent=1 // pred_check
      _
    $region7: #{tpu_custom_call.1} parent=1 // pred_check_branch
      %27 = sbr.rel (0) target = $region9
    $region8: #{tpu_custom_call.1} parent=1 // pred_region
      %s29 = ssub.s32 2048, 2048
      %30 = vsyncadd [#allocation6], %s29
      %s31 = sshll.u32 [#allocation5], 4
      %s32 = int_to_ptr.vmem [resolvable:$true] %s31
      %37 = dma.hbm_to_vmem [thread:$0]  %s1, 2048, %s32, [#allocation6], 128, 128, 8
    $region9: #{tpu_custom_call.1} parent=1 // pred_fallthru
      _
    // Predicated region
    $region10: #{tpu_custom_call.1} parent=1 // pred_check
      _
    $region11: #{tpu_custom_call.1} parent=1 // pred_check_branch
      %39 = sbr.rel (0) target = $region13
    $region12: #{tpu_custom_call.1} parent=1 // pred_region
      %s41 = ssub.s32 512, 512
      %42 = vsyncadd [#allocation6], %s41
      %s43 = sshll.u32 [#allocation7], 4
      %s44 = int_to_ptr.vmem [resolvable:$true] %s43
      %49 = dma.hbm_to_vmem [thread:$0]  %s2, 512, %s44, [#allocation6], 128, 128, 8
    $region13: #{tpu_custom_call.1} parent=1 // pred_fallthru
      _
    // Predicated region
    $region14: #{tpu_custom_call.1} parent=1 // pred_check
      _
    $region15: #{tpu_custom_call.1} parent=1 // pred_check_branch
      %51 = sbr.rel (0) target = $region17
    $region16: #{tpu_custom_call.1} parent=1 // pred_region
      _
    $region17: #{tpu_custom_call.1} parent=1 // pred_fallthru
      _
    // Predicated region
    $region18: #{tpu_custom_call.1} parent=1 // pred_check
      _
    $region19: #{tpu_custom_call.1} parent=1 // pred_check_branch
      %53 = sbr.rel (0) target = $region21
    $region20: #{tpu_custom_call.1} parent=1 // pred_region
      _
    $region21: #{tpu_custom_call.1} parent=1 // pred_fallthru
      _
    // Predicated region
    $region22: #{tpu_custom_call.1} parent=1 // pred_check
      _
    $region23: #{tpu_custom_call.1} parent=1 // pred_check_branch
      %55 = sbr.rel (0) target = $region25
    $region24: #{tpu_custom_call.1} parent=1 // pred_region
      _
    $region25: #{tpu_custom_call.1} parent=1 // pred_fallthru
      _
    // Predicated region
    $region26: #{tpu_custom_call.1} parent=1 // pred_check
      _
    $region27: #{tpu_custom_call.1} parent=1 // pred_check_branch
      %57 = sbr.rel (0) target = $region29
    $region28: #{tpu_custom_call.1} parent=1 // pred_region
      %58 = dma.done [#allocation4], 1024
    $region29: #{tpu_custom_call.1} parent=1 // pred_fallthru
      _
    // Predicated region
    $region30: #{tpu_custom_call.1} parent=1 // pred_check
      _
    $region31: #{tpu_custom_call.1} parent=1 // pred_check_branch
      %60 = sbr.rel (0) target = $region33
    $region32: #{tpu_custom_call.1} parent=1 // pred_region
      %61 = dma.done [#allocation6], 2048
    $region33: #{tpu_custom_call.1} parent=1 // pred_fallthru
      _
    // Predicated region
    $region34: #{tpu_custom_call.1} parent=1 // pred_check
      _
    $region35: #{tpu_custom_call.1} parent=1 // pred_check_branch
      %63 = sbr.rel (0) target = $region37
    $region36: #{tpu_custom_call.1} parent=1 // pred_region
      %64 = dma.done [#allocation6], 512
    $region37: #{tpu_custom_call.1} parent=1 // pred_fallthru
      _
    %v66 = vld [vmem:[#allocation3] sm:$0xff]
    %v67 = vld [vmem:[#allocation3 + $0x8] sm:$0xff]
    %v68 = vld [vmem:[#allocation3 + $0x10] sm:$0xff]
    %v69 = vld [vmem:[#allocation3 + $0x18] sm:$0xff]
    %v70 = vld [vmem:[#allocation3 + $0x20] sm:$0xff]
    %v71 = vld [vmem:[#allocation3 + $0x28] sm:$0xff]
    %v72 = vld [vmem:[#allocation3 + $0x30] sm:$0xff]
    %v73 = vld [vmem:[#allocation3 + $0x38] sm:$0xff]
    %v74 = vpack.c.bf16 %v67, %v66
    %v75 = vpack.c.bf16 %v69, %v68
    %v76 = vpack.c.bf16 %v71, %v70
    %v77 = vpack.c.bf16 %v73, %v72
    %v78 = vld [vmem:[#allocation5] sm:$0xff]
    %v79 = vld [vmem:[#allocation5 + $0x8] sm:$0xff]
    %v80 = vld [vmem:[#allocation5 + $0x10] sm:$0xff]
    %v81 = vld [vmem:[#allocation5 + $0x18] sm:$0xff]
    %v82 = vld [vmem:[#allocation5 + $0x20] sm:$0xff]
    %v83 = vld [vmem:[#allocation5 + $0x28] sm:$0xff]
    %v84 = vld [vmem:[#allocation5 + $0x30] sm:$0xff]
    %v85 = vld [vmem:[#allocation5 + $0x38] sm:$0xff]
    %v86 = vld [vmem:[#allocation5 + $0x40] sm:$0xff]
    %v87 = vld [vmem:[#allocation5 + $0x48] sm:$0xff]
    %v88 = vld [vmem:[#allocation5 + $0x50] sm:$0xff]
    %v89 = vld [vmem:[#allocation5 + $0x58] sm:$0xff]
    %v90 = vld [vmem:[#allocation5 + $0x60] sm:$0xff]
    %v91 = vld [vmem:[#allocation5 + $0x68] sm:$0xff]
    %v92 = vld [vmem:[#allocation5 + $0x70] sm:$0xff]
    %v93 = vld [vmem:[#allocation5 + $0x78] sm:$0xff]
    %v94 = vpack.c.bf16 %v79, %v78
    %v95 = vpack.c.bf16 %v81, %v80
    %v96 = vpack.c.bf16 %v83, %v82
    %v97 = vpack.c.bf16 %v85, %v84
    %v98 = vpack.c.bf16 %v87, %v86
    %v99 = vpack.c.bf16 %v89, %v88
    %v100 = vpack.c.bf16 %v91, %v90
    %v101 = vpack.c.bf16 %v93, %v92
    %v102 = vld [vmem:[%s3] sm:$0x1]
    %v104 = vlaneseq
    %v105 = vshrl.u32 %v104, 7
    %v106 = vsub.s32 0, %v105
    %v107 = vrot.slane %v102, %v106
    %109 = vmatprep.subr.bf16.mxu0 0
    %110 = vmatpush1.bf16.msra.mxu0 %v94
    %111 = vmatprep.subr.bf16.mxu0 0
    %112 = vmatpush1.bf16.msra.mxu0 %v95
    %113 = vmatprep.subr.bf16.mxu0 0
    %114 = vmatpush1.bf16.msra.mxu0 %v96
    %115 = vmatprep.subr.bf16.mxu0 0
    %116 = vmatpush1.bf16.msra.mxu0 %v97
    %117 = vmatprep.subr.bf16.mxu0 0
    %118 = vmatpush1.bf16.msra.mxu0 %v98
    %119 = vmatprep.subr.bf16.mxu0 0
    %120 = vmatpush1.bf16.msra.mxu0 %v99
    %121 = vmatprep.subr.bf16.mxu0 0
    %122 = vmatpush1.bf16.msra.mxu0 %v100
    %123 = vmatprep.subr.bf16.mxu0 0
    %124 = vmatpush1.bf16.msra.mxu0 %v101
    %125 = vmatprep.subr.bf16.mxu0 0
    %126 = vmatpush1.bf16.msra.mxu0 0
    %127 = vmatprep.subr.bf16.mxu0 0
    %128 = vmatpush1.bf16.msra.mxu0 0
    %129 = vmatprep.subr.bf16.mxu0 0
    %130 = vmatpush1.bf16.msra.mxu0 0
    %131 = vmatprep.subr.bf16.mxu0 0
    %132 = vmatpush1.bf16.msra.mxu0 0
    %133 = vmatprep.subr.bf16.mxu0 0
    %134 = vmatpush1.bf16.msra.mxu0 0
    %135 = vmatprep.subr.bf16.mxu0 0
    %136 = vmatpush1.bf16.msra.mxu0 0
    %137 = vmatprep.subr.bf16.mxu0 0
    %138 = vmatpush1.bf16.msra.mxu0 0
    %139 = vmatprep.subr.bf16.mxu0 0
    %140 = vmatpush1.bf16.msra.mxu0 0
    %141 = vmatprep.mubr.bf16.mxu0 0
    %142 = vmatmul.mubr.bf16.gmra.mrb[0].mxu0 %v74
    %v143 = vpop.f32.mrb[0].mxu0
    %v144 = vadd.f32 %v107, %v143
    %v145 = vpop.f32.mrb[0].mxu0
    %v146 = vpop.f32.mrb[0].mxu0
    %v147 = vadd.f32 %v107, %v146
    %v148 = vpop.f32.mrb[0].mxu0
    %149 = vmatprep.mubr.bf16.mxu0 0
    %150 = vmatmul.mubr.bf16.gmra.mrb[0].mxu0 %v75
    %v151 = vpop.f32.mrb[0].mxu0
    %v152 = vadd.f32 %v107, %v151
    %v153 = vpop.f32.mrb[0].mxu0
    %v154 = vpop.f32.mrb[0].mxu0
    %v155 = vadd.f32 %v107, %v154
    %v156 = vpop.f32.mrb[0].mxu0
    %157 = vmatprep.mubr.bf16.mxu0 0
    %158 = vmatmul.mubr.bf16.gmra.mrb[0].mxu0 %v76
    %v159 = vpop.f32.mrb[0].mxu0
    %v160 = vadd.f32 %v107, %v159
    %v161 = vpop.f32.mrb[0].mxu0
    %v162 = vpop.f32.mrb[0].mxu0
    %v163 = vadd.f32 %v107, %v162
    %v164 = vpop.f32.mrb[0].mxu0
    %165 = vmatprep.mubr.bf16.mxu0 0
    %166 = vmatmul.mubr.bf16.gmra.mrb[0].mxu0 %v77
    %v167 = vpop.f32.mrb[0].mxu0
    %v168 = vadd.f32 %v107, %v167
    %v169 = vpop.f32.mrb[0].mxu0
    %v170 = vpop.f32.mrb[0].mxu0
    %v171 = vadd.f32 %v107, %v170
    %v172 = vpop.f32.mrb[0].mxu0
    %173 = vdwg.mxu0
    %v174 = vld [vmem:[#allocation7] sm:$0xff]
    %v175 = vld [vmem:[#allocation7 + $0x8] sm:$0xff]
    %v176 = vld [vmem:[#allocation7 + $0x10] sm:$0xff]
    %v177 = vld [vmem:[#allocation7 + $0x18] sm:$0xff]
    %v178 = vpack.c.bf16 %v175, %v174
    %v179 = vpack.c.bf16 %v177, %v176
    %vm180 = vcmask 261120
    %v182 = vsel %vm180, 0, 0
    %184 = vmatprep.subr.bf16.mxu0 0
    %185 = vmatpush1.bf16.msra.mxu0 %v178
    %186 = vmatprep.subr.bf16.mxu0 0
    %187 = vmatpush1.bf16.msra.mxu0 %v179
    %188 = vmatprep.subr.bf16.mxu0 0
    %189 = vmatpush1.bf16.msra.mxu0 0
    %190 = vmatprep.subr.bf16.mxu0 0
    %191 = vmatpush1.bf16.msra.mxu0 0
    %192 = vmatprep.subr.bf16.mxu0 0
    %193 = vmatpush1.bf16.msra.mxu0 0
    %194 = vmatprep.subr.bf16.mxu0 0
    %195 = vmatpush1.bf16.msra.mxu0 0
    %196 = vmatprep.subr.bf16.mxu0 0
    %197 = vmatpush1.bf16.msra.mxu0 0
    %198 = vmatprep.subr.bf16.mxu0 0
    %199 = vmatpush1.bf16.msra.mxu0 0
    %200 = vmatprep.subr.bf16.mxu0 0
    %201 = vmatpush1.bf16.msra.mxu0 0
    %202 = vmatprep.subr.bf16.mxu0 0
    %203 = vmatpush1.bf16.msra.mxu0 0
    %204 = vmatprep.subr.bf16.mxu0 0
    %205 = vmatpush1.bf16.msra.mxu0 0
    %206 = vmatprep.subr.bf16.mxu0 0
    %207 = vmatpush1.bf16.msra.mxu0 0
    %208 = vmatprep.subr.bf16.mxu0 0
    %209 = vmatpush1.bf16.msra.mxu0 0
    %210 = vmatprep.subr.bf16.mxu0 0
    %211 = vmatpush1.bf16.msra.mxu0 0
    %212 = vmatprep.subr.bf16.mxu0 0
    %213 = vmatpush1.bf16.msra.mxu0 0
    %214 = vmatprep.subr.bf16.mxu0 0
    %215 = vmatpush1.bf16.msra.mxu0 0
    %216 = vmatprep.mubr.bf16.mxu0 0
    %217 = vmatmul.mubr.bf16.gmra.mrb[0].mxu0 %v182
    %v218 = vpop.f32.mrb[0].mxu0
    %v219 = vadd.f32 0.0, %v218
    %v220 = vpop.f32.mrb[0].mxu0
    %v221 = vpop.f32.mrb[0].mxu0
    %v222 = vpop.f32.mrb[0].mxu0
    %223 = vdwg.mxu0
    %v224 = vadd.f32 %v144, %v219
    %v225 = vxor.u32 %v224, 2147483648
    %v226 = vmul.f32 %v225, 1.442695
    %v227 = vpow.pop %v226
    %v228 = vadd.f32 %v227, 1.0
    %v229 = vrcp.pop %v228
    %v230 = vmul.f32 1.0, %v229
    %v231 = vtanh.pop %v224
    %v232 = vmul.f32 %v230, 0.0
    %234 = vrot.lane.b32.xlu0 %v231, 64
    %v235 = vpop.permute.xlu0 %234
    %v237 = vmul.f32 %v230, %v235
    %239 = vrot.lane.b32.xlu0 %v237, 32
    %v240 = vpop.permute.xlu0 %239
    %v242 = vadd.f32 %v232, %v240
    %v243 = vtanh.pop %v242
    %245 = vrot.lane.b32.xlu0 %v243, 64
    %v246 = vpop.permute.xlu0 %245
    %v248 = vmul.f32 %v230, %v246
    %v249 = vpack.c.bf16 %v248, %v248
    %251 = vrot.lane.b32.xlu0 %v249, 32
    %v252 = vpop.permute.xlu0 %251
    %v254 = vsel %vm180, %v252, 0
    %256 = vmatprep.subr.bf16.mxu0 0
    %257 = vmatpush1.bf16.msra.mxu0 %v178
    %258 = vmatprep.subr.bf16.mxu0 0
    %259 = vmatpush1.bf16.msra.mxu0 %v179
    %260 = vmatprep.subr.bf16.mxu0 0
    %261 = vmatpush1.bf16.msra.mxu0 0
    %262 = vmatprep.subr.bf16.mxu0 0
    %263 = vmatpush1.bf16.msra.mxu0 0
    %264 = vmatprep.subr.bf16.mxu0 0
    %265 = vmatpush1.bf16.msra.mxu0 0
    %266 = vmatprep.subr.bf16.mxu0 0
    %267 = vmatpush1.bf16.msra.mxu0 0
    %268 = vmatprep.subr.bf16.mxu0 0
    %269 = vmatpush1.bf16.msra.mxu0 0
    %270 = vmatprep.subr.bf16.mxu0 0
    %271 = vmatpush1.bf16.msra.mxu0 0
    %272 = vmatprep.subr.bf16.mxu0 0
    %273 = vmatpush1.bf16.msra.mxu0 0
    %274 = vmatprep.subr.bf16.mxu0 0
    %275 = vmatpush1.bf16.msra.mxu0 0
    %276 = vmatprep.subr.bf16.mxu0 0
    %277 = vmatpush1.bf16.msra.mxu0 0
    %278 = vmatprep.subr.bf16.mxu0 0
    %279 = vmatpush1.bf16.msra.mxu0 0
    %280 = vmatprep.subr.bf16.mxu0 0
    %281 = vmatpush1.bf16.msra.mxu0 0
    %282 = vmatprep.subr.bf16.mxu0 0
    %283 = vmatpush1.bf16.msra.mxu0 0
    %284 = vmatprep.subr.bf16.mxu0 0
    %285 = vmatpush1.bf16.msra.mxu0 0
    %286 = vmatprep.subr.bf16.mxu0 0
    %287 = vmatpush1.bf16.msra.mxu0 0
    %288 = vmatprep.mubr.bf16.mxu0 0
    %289 = vmatmul.mubr.bf16.gmra.mrb[0].mxu0 %v254
    %v290 = vpop.f32.mrb[0].mxu0
    %v291 = vadd.f32 0.0, %v290
    %v292 = vpop.f32.mrb[0].mxu0
    %v293 = vpop.f32.mrb[0].mxu0
    %v294 = vpop.f32.mrb[0].mxu0
    %295 = vdwg.mxu0
    %v296 = vadd.f32 %v147, %v291
    %v297 = vxor.u32 %v296, 2147483648
    %v298 = vmul.f32 %v297, 1.442695
    %v299 = vpow.pop %v298
    %v300 = vadd.f32 %v299, 1.0
    %v301 = vrcp.pop %v300
    %v302 = vmul.f32 1.0, %v301
    %v303 = vtanh.pop %v296
    %v304 = vmul.f32 %v302, %v242
    %306 = vrot.lane.b32.xlu0 %v303, 64
    %v307 = vpop.permute.xlu0 %306
    %v309 = vmul.f32 %v302, %v307
    %311 = vrot.lane.b32.xlu0 %v309, 32
    %v312 = vpop.permute.xlu0 %311
    %v314 = vadd.f32 %v304, %v312
    %v315 = vtanh.pop %v314
    %317 = vrot.lane.b32.xlu0 %v315, 64
    %v318 = vpop.permute.xlu0 %317
    %v320 = vmul.f32 %v302, %v318
    %v321 = vpack.c.bf16 %v320, %v320
    %323 = vrot.lane.b32.xlu0 %v321, 32
    %v324 = vpop.permute.xlu0 %323
    %v326 = vsel %vm180, %v324, 0
    %328 = vmatprep.subr.bf16.mxu0 0
    %329 = vmatpush1.bf16.msra.mxu0 %v178
    %330 = vmatprep.subr.bf16.mxu0 0
    %331 = vmatpush1.bf16.msra.mxu0 %v179
    %332 = vmatprep.subr.bf16.mxu0 0
    %333 = vmatpush1.bf16.msra.mxu0 0
    %334 = vmatprep.subr.bf16.mxu0 0
    %335 = vmatpush1.bf16.msra.mxu0 0
    %336 = vmatprep.subr.bf16.mxu0 0
    %337 = vmatpush1.bf16.msra.mxu0 0
    %338 = vmatprep.subr.bf16.mxu0 0
    %339 = vmatpush1.bf16.msra.mxu0 0
    %340 = vmatprep.subr.bf16.mxu0 0
    %341 = vmatpush1.bf16.msra.mxu0 0
    %342 = vmatprep.subr.bf16.mxu0 0
    %343 = vmatpush1.bf16.msra.mxu0 0
    %344 = vmatprep.subr.bf16.mxu0 0
    %345 = vmatpush1.bf16.msra.mxu0 0
    %346 = vmatprep.subr.bf16.mxu0 0
    %347 = vmatpush1.bf16.msra.mxu0 0
    %348 = vmatprep.subr.bf16.mxu0 0
    %349 = vmatpush1.bf16.msra.mxu0 0
    %350 = vmatprep.subr.bf16.mxu0 0
    %351 = vmatpush1.bf16.msra.mxu0 0
    %352 = vmatprep.subr.bf16.mxu0 0
    %353 = vmatpush1.bf16.msra.mxu0 0
    %354 = vmatprep.subr.bf16.mxu0 0
    %355 = vmatpush1.bf16.msra.mxu0 0
    %356 = vmatprep.subr.bf16.mxu0 0
    %357 = vmatpush1.bf16.msra.mxu0 0
    %358 = vmatprep.subr.bf16.mxu0 0
    %359 = vmatpush1.bf16.msra.mxu0 0
    %360 = vmatprep.mubr.bf16.mxu0 0
    %361 = vmatmul.mubr.bf16.gmra.mrb[0].mxu0 %v326
    %v362 = vpop.f32.mrb[0].mxu0
    %v363 = vadd.f32 0.0, %v362
    %v364 = vpop.f32.mrb[0].mxu0
    %v365 = vpop.f32.mrb[0].mxu0
    %v366 = vpop.f32.mrb[0].mxu0
    %367 = vdwg.mxu0
    %v368 = vadd.f32 %v152, %v363
    %v369 = vxor.u32 %v368, 2147483648
    %v370 = vmul.f32 %v369, 1.442695
    %v371 = vpow.pop %v370
    %v372 = vadd.f32 %v371, 1.0
    %v373 = vrcp.pop %v372
    %v374 = vmul.f32 1.0, %v373
    %v375 = vtanh.pop %v368
    %v376 = vmul.f32 %v374, %v314
    %378 = vrot.lane.b32.xlu0 %v375, 64
    %v379 = vpop.permute.xlu0 %378
    %v381 = vmul.f32 %v374, %v379
    %383 = vrot.lane.b32.xlu0 %v381, 32
    %v384 = vpop.permute.xlu0 %383
    %v386 = vadd.f32 %v376, %v384
    %v387 = vtanh.pop %v386
    %389 = vrot.lane.b32.xlu0 %v387, 64
    %v390 = vpop.permute.xlu0 %389
    %v392 = vmul.f32 %v374, %v390
    %v393 = vpack.c.bf16 %v392, %v392
    %395 = vrot.lane.b32.xlu0 %v393, 32
    %v396 = vpop.permute.xlu0 %395
    %v398 = vsel %vm180, %v396, 0
    %400 = vmatprep.subr.bf16.mxu0 0
    %401 = vmatpush1.bf16.msra.mxu0 %v178
    %402 = vmatprep.subr.bf16.mxu0 0
    %403 = vmatpush1.bf16.msra.mxu0 %v179
    %404 = vmatprep.subr.bf16.mxu0 0
    %405 = vmatpush1.bf16.msra.mxu0 0
    %406 = vmatprep.subr.bf16.mxu0 0
    %407 = vmatpush1.bf16.msra.mxu0 0
    %408 = vmatprep.subr.bf16.mxu0 0
    %409 = vmatpush1.bf16.msra.mxu0 0
    %410 = vmatprep.subr.bf16.mxu0 0
    %411 = vmatpush1.bf16.msra.mxu0 0
    %412 = vmatprep.subr.bf16.mxu0 0
    %413 = vmatpush1.bf16.msra.mxu0 0
    %414 = vmatprep.subr.bf16.mxu0 0
    %415 = vmatpush1.bf16.msra.mxu0 0
    %416 = vmatprep.subr.bf16.mxu0 0
    %417 = vmatpush1.bf16.msra.mxu0 0
    %418 = vmatprep.subr.bf16.mxu0 0
    %419 = vmatpush1.bf16.msra.mxu0 0
    %420 = vmatprep.subr.bf16.mxu0 0
    %421 = vmatpush1.bf16.msra.mxu0 0
    %422 = vmatprep.subr.bf16.mxu0 0
    %423 = vmatpush1.bf16.msra.mxu0 0
    %424 = vmatprep.subr.bf16.mxu0 0
    %425 = vmatpush1.bf16.msra.mxu0 0
    %426 = vmatprep.subr.bf16.mxu0 0
    %427 = vmatpush1.bf16.msra.mxu0 0
    %428 = vmatprep.subr.bf16.mxu0 0
    %429 = vmatpush1.bf16.msra.mxu0 0
    %430 = vmatprep.subr.bf16.mxu0 0
    %431 = vmatpush1.bf16.msra.mxu0 0
    %432 = vmatprep.mubr.bf16.mxu0 0
    %433 = vmatmul.mubr.bf16.gmra.mrb[0].mxu0 %v398
    %v434 = vpop.f32.mrb[0].mxu0
    %v435 = vadd.f32 0.0, %v434
    %v436 = vpop.f32.mrb[0].mxu0
    %v437 = vpop.f32.mrb[0].mxu0
    %v438 = vpop.f32.mrb[0].mxu0
    %439 = vdwg.mxu0
    %v440 = vadd.f32 %v155, %v435
    %v441 = vxor.u32 %v440, 2147483648
    %v442 = vmul.f32 %v441, 1.442695
    %v443 = vpow.pop %v442
    %v444 = vadd.f32 %v443, 1.0
    %v445 = vrcp.pop %v444
    %v446 = vmul.f32 1.0, %v445
    %v447 = vtanh.pop %v440
    %v448 = vmul.f32 %v446, %v386
    %450 = vrot.lane.b32.xlu0 %v447, 64
    %v451 = vpop.permute.xlu0 %450
    %v453 = vmul.f32 %v446, %v451
    %455 = vrot.lane.b32.xlu0 %v453, 32
    %v456 = vpop.permute.xlu0 %455
    %v458 = vadd.f32 %v448, %v456
    %v459 = vtanh.pop %v458
    %461 = vrot.lane.b32.xlu0 %v459, 64
    %v462 = vpop.permute.xlu0 %461
    %v464 = vmul.f32 %v446, %v462
    %v465 = vpack.c.bf16 %v464, %v464
    %467 = vrot.lane.b32.xlu0 %v465, 32
    %v468 = vpop.permute.xlu0 %467
    %v470 = vsel %vm180, %v468, 0
    %472 = vmatprep.subr.bf16.mxu0 0
    %473 = vmatpush1.bf16.msra.mxu0 %v178
    %474 = vmatprep.subr.bf16.mxu0 0
    %475 = vmatpush1.bf16.msra.mxu0 %v179
    %476 = vmatprep.subr.bf16.mxu0 0
    %477 = vmatpush1.bf16.msra.mxu0 0
    %478 = vmatprep.subr.bf16.mxu0 0
    %479 = vmatpush1.bf16.msra.mxu0 0
    %480 = vmatprep.subr.bf16.mxu0 0
    %481 = vmatpush1.bf16.msra.mxu0 0
    %482 = vmatprep.subr.bf16.mxu0 0
    %483 = vmatpush1.bf16.msra.mxu0 0
    %484 = vmatprep.subr.bf16.mxu0 0
    %485 = vmatpush1.bf16.msra.mxu0 0
    %486 = vmatprep.subr.bf16.mxu0 0
    %487 = vmatpush1.bf16.msra.mxu0 0
    %488 = vmatprep.subr.bf16.mxu0 0
    %489 = vmatpush1.bf16.msra.mxu0 0
    %490 = vmatprep.subr.bf16.mxu0 0
    %491 = vmatpush1.bf16.msra.mxu0 0
    %492 = vmatprep.subr.bf16.mxu0 0
    %493 = vmatpush1.bf16.msra.mxu0 0
    %494 = vmatprep.subr.bf16.mxu0 0
    %495 = vmatpush1.bf16.msra.mxu0 0
    %496 = vmatprep.subr.bf16.mxu0 0
    %497 = vmatpush1.bf16.msra.mxu0 0
    %498 = vmatprep.subr.bf16.mxu0 0
    %499 = vmatpush1.bf16.msra.mxu0 0
    %500 = vmatprep.subr.bf16.mxu0 0
    %501 = vmatpush1.bf16.msra.mxu0 0
    %502 = vmatprep.subr.bf16.mxu0 0
    %503 = vmatpush1.bf16.msra.mxu0 0
    %504 = vmatprep.mubr.bf16.mxu0 0
    %505 = vmatmul.mubr.bf16.gmra.mrb[0].mxu0 %v470
    %v506 = vpop.f32.mrb[0].mxu0
    %v507 = vadd.f32 0.0, %v506
    %v508 = vpop.f32.mrb[0].mxu0
    %v509 = vpop.f32.mrb[0].mxu0
    %v510 = vpop.f32.mrb[0].mxu0
    %511 = vdwg.mxu0
    %v512 = vadd.f32 %v160, %v507
    %v513 = vxor.u32 %v512, 2147483648
    %v514 = vmul.f32 %v513, 1.442695
    %v515 = vpow.pop %v514
    %v516 = vadd.f32 %v515, 1.0
    %v517 = vrcp.pop %v516
    %v518 = vmul.f32 1.0, %v517
    %v519 = vtanh.pop %v512
    %v520 = vmul.f32 %v518, %v458
    %522 = vrot.lane.b32.xlu0 %v519, 64
    %v523 = vpop.permute.xlu0 %522
    %v525 = vmul.f32 %v518, %v523
    %527 = vrot.lane.b32.xlu0 %v525, 32
    %v528 = vpop.permute.xlu0 %527
    %v530 = vadd.f32 %v520, %v528
    %v531 = vtanh.pop %v530
    %533 = vrot.lane.b32.xlu0 %v531, 64
    %v534 = vpop.permute.xlu0 %533
    %v536 = vmul.f32 %v518, %v534
    %v537 = vpack.c.bf16 %v536, %v536
    %539 = vrot.lane.b32.xlu0 %v537, 32
    %v540 = vpop.permute.xlu0 %539
    %v542 = vsel %vm180, %v540, 0
    %544 = vmatprep.subr.bf16.mxu0 0
    %545 = vmatpush1.bf16.msra.mxu0 %v178
    %546 = vmatprep.subr.bf16.mxu0 0
    %547 = vmatpush1.bf16.msra.mxu0 %v179
    %548 = vmatprep.subr.bf16.mxu0 0
    %549 = vmatpush1.bf16.msra.mxu0 0
    %550 = vmatprep.subr.bf16.mxu0 0
    %551 = vmatpush1.bf16.msra.mxu0 0
    %552 = vmatprep.subr.bf16.mxu0 0
    %553 = vmatpush1.bf16.msra.mxu0 0
    %554 = vmatprep.subr.bf16.mxu0 0
    %555 = vmatpush1.bf16.msra.mxu0 0
    %556 = vmatprep.subr.bf16.mxu0 0
    %557 = vmatpush1.bf16.msra.mxu0 0
    %558 = vmatprep.subr.bf16.mxu0 0
    %559 = vmatpush1.bf16.msra.mxu0 0
    %560 = vmatprep.subr.bf16.mxu0 0
    %561 = vmatpush1.bf16.msra.mxu0 0
    %562 = vmatprep.subr.bf16.mxu0 0
    %563 = vmatpush1.bf16.msra.mxu0 0
    %564 = vmatprep.subr.bf16.mxu0 0
    %565 = vmatpush1.bf16.msra.mxu0 0
    %566 = vmatprep.subr.bf16.mxu0 0
    %567 = vmatpush1.bf16.msra.mxu0 0
    %568 = vmatprep.subr.bf16.mxu0 0
    %569 = vmatpush1.bf16.msra.mxu0 0
    %570 = vmatprep.subr.bf16.mxu0 0
    %571 = vmatpush1.bf16.msra.mxu0 0
    %572 = vmatprep.subr.bf16.mxu0 0
    %573 = vmatpush1.bf16.msra.mxu0 0
    %574 = vmatprep.subr.bf16.mxu0 0
    %575 = vmatpush1.bf16.msra.mxu0 0
    %576 = vmatprep.mubr.bf16.mxu0 0
    %577 = vmatmul.mubr.bf16.gmra.mrb[0].mxu0 %v542
    %v578 = vpop.f32.mrb[0].mxu0
    %v579 = vadd.f32 0.0, %v578
    %v580 = vpop.f32.mrb[0].mxu0
    %v581 = vpop.f32.mrb[0].mxu0
    %v582 = vpop.f32.mrb[0].mxu0
    %583 = vdwg.mxu0
    %v584 = vadd.f32 %v163, %v579
    %v585 = vxor.u32 %v584, 2147483648
    %v586 = vmul.f32 %v585, 1.442695
    %v587 = vpow.pop %v586
    %v588 = vadd.f32 %v587, 1.0
    %v589 = vrcp.pop %v588
    %v590 = vmul.f32 1.0, %v589
    %v591 = vtanh.pop %v584
    %v592 = vmul.f32 %v590, %v530
    %594 = vrot.lane.b32.xlu0 %v591, 64
    %v595 = vpop.permute.xlu0 %594
    %v597 = vmul.f32 %v590, %v595
    %599 = vrot.lane.b32.xlu0 %v597, 32
    %v600 = vpop.permute.xlu0 %599
    %v602 = vadd.f32 %v592, %v600
    %v603 = vtanh.pop %v602
    %605 = vrot.lane.b32.xlu0 %v603, 64
    %v606 = vpop.permute.xlu0 %605
    %v608 = vmul.f32 %v590, %v606
    %v609 = vpack.c.bf16 %v608, %v608
    %611 = vrot.lane.b32.xlu0 %v609, 32
    %v612 = vpop.permute.xlu0 %611
    %v614 = vsel %vm180, %v612, 0
    %616 = vmatprep.subr.bf16.mxu0 0
    %617 = vmatpush1.bf16.msra.mxu0 %v178
    %618 = vmatprep.subr.bf16.mxu0 0
    %619 = vmatpush1.bf16.msra.mxu0 %v179
    %620 = vmatprep.subr.bf16.mxu0 0
    %621 = vmatpush1.bf16.msra.mxu0 0
    %622 = vmatprep.subr.bf16.mxu0 0
    %623 = vmatpush1.bf16.msra.mxu0 0
    %624 = vmatprep.subr.bf16.mxu0 0
    %625 = vmatpush1.bf16.msra.mxu0 0
    %626 = vmatprep.subr.bf16.mxu0 0
    %627 = vmatpush1.bf16.msra.mxu0 0
    %628 = vmatprep.subr.bf16.mxu0 0
    %629 = vmatpush1.bf16.msra.mxu0 0
    %630 = vmatprep.subr.bf16.mxu0 0
    %631 = vmatpush1.bf16.msra.mxu0 0
    %632 = vmatprep.subr.bf16.mxu0 0
    %633 = vmatpush1.bf16.msra.mxu0 0
    %634 = vmatprep.subr.bf16.mxu0 0
    %635 = vmatpush1.bf16.msra.mxu0 0
    %636 = vmatprep.subr.bf16.mxu0 0
    %637 = vmatpush1.bf16.msra.mxu0 0
    %638 = vmatprep.subr.bf16.mxu0 0
    %639 = vmatpush1.bf16.msra.mxu0 0
    %640 = vmatprep.subr.bf16.mxu0 0
    %641 = vmatpush1.bf16.msra.mxu0 0
    %642 = vmatprep.subr.bf16.mxu0 0
    %643 = vmatpush1.bf16.msra.mxu0 0
    %644 = vmatprep.subr.bf16.mxu0 0
    %645 = vmatpush1.bf16.msra.mxu0 0
    %646 = vmatprep.subr.bf16.mxu0 0
    %647 = vmatpush1.bf16.msra.mxu0 0
    %648 = vmatprep.mubr.bf16.mxu0 0
    %649 = vmatmul.mubr.bf16.gmra.mrb[0].mxu0 %v614
    %v650 = vpop.f32.mrb[0].mxu0
    %v651 = vadd.f32 0.0, %v650
    %v652 = vpop.f32.mrb[0].mxu0
    %v653 = vpop.f32.mrb[0].mxu0
    %v654 = vpop.f32.mrb[0].mxu0
    %655 = vdwg.mxu0
    %v656 = vadd.f32 %v168, %v651
    %v657 = vxor.u32 %v656, 2147483648
    %v658 = vmul.f32 %v657, 1.442695
    %v659 = vpow.pop %v658
    %v660 = vadd.f32 %v659, 1.0
    %v661 = vrcp.pop %v660
    %v662 = vmul.f32 1.0, %v661
    %v663 = vtanh.pop %v656
    %v664 = vmul.f32 %v662, %v602
    %666 = vrot.lane.b32.xlu0 %v663, 64
    %v667 = vpop.permute.xlu0 %666
    %v669 = vmul.f32 %v662, %v667
    %671 = vrot.lane.b32.xlu0 %v669, 32
    %v672 = vpop.permute.xlu0 %671
    %v674 = vadd.f32 %v664, %v672
    %v675 = vtanh.pop %v674
    %677 = vrot.lane.b32.xlu0 %v675, 64
    %v678 = vpop.permute.xlu0 %677
    %v680 = vmul.f32 %v662, %v678
    %v681 = vpack.c.bf16 %v680, %v680
    %683 = vrot.lane.b32.xlu0 %v681, 32
    %v684 = vpop.permute.xlu0 %683
    %v686 = vsel %vm180, %v684, 0
    %688 = vmatprep.subr.bf16.mxu0 0
    %689 = vmatpush1.bf16.msra.mxu0 %v178
    %690 = vmatprep.subr.bf16.mxu0 0
    %691 = vmatpush1.bf16.msra.mxu0 %v179
    %692 = vmatprep.subr.bf16.mxu0 0
    %693 = vmatpush1.bf16.msra.mxu0 0
    %694 = vmatprep.subr.bf16.mxu0 0
    %695 = vmatpush1.bf16.msra.mxu0 0
    %696 = vmatprep.subr.bf16.mxu0 0
    %697 = vmatpush1.bf16.msra.mxu0 0
    %698 = vmatprep.subr.bf16.mxu0 0
    %699 = vmatpush1.bf16.msra.mxu0 0
    %700 = vmatprep.subr.bf16.mxu0 0
    %701 = vmatpush1.bf16.msra.mxu0 0
    %702 = vmatprep.subr.bf16.mxu0 0
    %703 = vmatpush1.bf16.msra.mxu0 0
    %704 = vmatprep.subr.bf16.mxu0 0
    %705 = vmatpush1.bf16.msra.mxu0 0
    %706 = vmatprep.subr.bf16.mxu0 0
    %707 = vmatpush1.bf16.msra.mxu0 0
    %708 = vmatprep.subr.bf16.mxu0 0
    %709 = vmatpush1.bf16.msra.mxu0 0
    %710 = vmatprep.subr.bf16.mxu0 0
    %711 = vmatpush1.bf16.msra.mxu0 0
    %712 = vmatprep.subr.bf16.mxu0 0
    %713 = vmatpush1.bf16.msra.mxu0 0
    %714 = vmatprep.subr.bf16.mxu0 0
    %715 = vmatpush1.bf16.msra.mxu0 0
    %716 = vmatprep.subr.bf16.mxu0 0
    %717 = vmatpush1.bf16.msra.mxu0 0
    %718 = vmatprep.subr.bf16.mxu0 0
    %719 = vmatpush1.bf16.msra.mxu0 0
    %720 = vmatprep.mubr.bf16.mxu0 0
    %721 = vmatmul.mubr.bf16.gmra.mrb[0].mxu0 %v686
    %v722 = vpop.f32.mrb[0].mxu0
    %v723 = vadd.f32 0.0, %v722
    %v724 = vpop.f32.mrb[0].mxu0
    %v725 = vpop.f32.mrb[0].mxu0
    %v726 = vpop.f32.mrb[0].mxu0
    %727 = vdwg.mxu0
    %v728 = vadd.f32 %v171, %v723
    %v729 = vxor.u32 %v728, 2147483648
    %v730 = vmul.f32 %v729, 1.442695
    %v731 = vpow.pop %v730
    %v732 = vadd.f32 %v731, 1.0
    %v733 = vrcp.pop %v732
    %v734 = vmul.f32 1.0, %v733
    %v735 = vtanh.pop %v728
    %v736 = vmul.f32 %v734, %v674
    %738 = vrot.lane.b32.xlu0 %v735, 64
    %v739 = vpop.permute.xlu0 %738
    %v741 = vmul.f32 %v734, %v739
    %743 = vrot.lane.b32.xlu0 %v741, 32
    %v744 = vpop.permute.xlu0 %743
    %v746 = vadd.f32 %v736, %v744
    %v747 = vtanh.pop %v746
    %749 = vrot.lane.b32.xlu0 %v747, 64
    %v750 = vpop.permute.xlu0 %749
    %v752 = vmul.f32 %v734, %v750
    %v753 = vmax.f32 %v752, 0.0
    %v754 = vld [vmem:[%s4] sm:$0x1]
    %v756 = vlaneseq
    %v757 = vshrl.u32 %v756, 7
    %v758 = vsub.s32 0, %v757
    %v759 = vrot.slane %v754, %v758
    %760 = vrot.lane.b32.xlu0 %v759, 96
    %v761 = vpop.permute.xlu0 %760
    %v763 = vmul.f32 %v753, %v761
    %765 = vrot.lane.b32.xlu0 %v763, 32
    %v766 = vpop.permute.xlu0 %765
    %v768 = vsel %vm180, %v766, 0.0
    %769 = vadd.xlane.f32.xlu0 %v768
    %v770 = vpop.xlane.xlu0 %769
    %s771 = sld [smem:[#allocation2]]
    %v772 = vstv %s771
    %v773 = vadd.f32 %v770, %v772
    %v774 = vxor.u32 %v773, 2147483648
    %v775 = vmul.f32 %v774, 1.442695
    %v776 = vpow.pop %v775
    %v777 = vadd.f32 %v776, 1.0
    %v778 = vrcp.pop %v777
    %v779 = vmul.f32 1.0, %v778
    %vm780 = vcmask 7168
    %781 = vst.msk [vmem:[%s6] sm:$0xff] %vm780, %v779
    // Predicated region
    $region38: #{tpu_custom_call.1} parent=1 // pred_check
      _
    $region39: #{tpu_custom_call.1} parent=1 // pred_check_branch
      %783 = sbr.rel (0) target = $region41
    $region40: #{tpu_custom_call.1} parent=1 // pred_region
      _
    $region41: #{tpu_custom_call.1} parent=1 // pred_fallthru
      _
    // Predicated region
    $region42: #{tpu_custom_call.1} parent=1 // pred_check
      _
    $region43: #{tpu_custom_call.1} parent=1 // pred_check_branch
      %785 = sbr.rel (0) target = $region45
    $region44: #{tpu_custom_call.1} parent=1 // pred_region
      _
    $region45: #{tpu_custom_call.1} parent=1 // pred_fallthru
      _
    %786 = vsyncpa [#allocation4], 1
    %787 = vsyncpa [#allocation6], 1

</llo_original>
